<compile_context>
chip_gen: v7x
topology: tpu7x:2x2x1
jax: 0.10.0
libtpu: 0.0.40
codegen_flags: <defaults>
</compile_context>

<pallas_src>
import jax
import jax.numpy as jnp
from jax.experimental import pallas as pl
from jax.experimental.pallas import tpu as pltpu


def _round_up(x, m):
    return ((x + m - 1) // m) * m


def selfweight_kernel(x_ref, w_ref, b_ref, o_ref):
    # Cast x to the MXU feed dtype (no-op for the f32 path), matmul with f32
    # accumulation (MXU), bias add (VPU), tanh (EUP), store in o_ref.dtype.
    xv = x_ref[...].astype(w_ref.dtype)
    y = jnp.dot(xv, w_ref[...], preferred_element_type=jnp.float32)
    y = y + b_ref[...]                      # (1, tn) broadcasts over tm rows
    o_ref[...] = jnp.tanh(y).astype(o_ref.dtype)


def prepare_params(w, b, *, use_bf16=True):
    """One-time (init-time) parameter prep, hoisted out of the per-call path.

    w: (O, T) nn.Linear weight; b: (O,).
    Returns (w_p, b_p) with w_p: (T, Op) in the MXU feed dtype and
    b_p: (1, Op) f32, where Op = round_up(O, 128) (lane-aligned, zero-padded).
    """
    O, T = w.shape
    assert b.shape == (O,)
    Op = _round_up(O, 128)
    wdt = jnp.bfloat16 if use_bf16 else jnp.float32
    w_p = jnp.zeros((T, Op), wdt).at[:, :O].set(jnp.transpose(w).astype(wdt))
    b_p = jnp.zeros((1, Op), jnp.float32).at[0, :O].set(b.astype(jnp.float32))
    return w_p, b_p


def self_weight(x, w_p, b_p, *, node_emb_size, out_size,
                tm=512, tn=512, out_dtype=jnp.bfloat16, reshape_output=True):
    """x: (B, T) f32 (cast to w_p.dtype inside the kernel).
    w_p, b_p: outputs of `prepare_params`.

    Returns (B, 3, out_size, node_emb_size) if reshape_output else the flat
    lane-dense (B, O) slab (preferred for downstream Pallas consumers).
    """
    B, T = x.shape
    O = 3 * node_emb_size * out_size
    Op = w_p.shape[1]
    assert w_p.shape[0] == T and Op >= O and Op % 128 == 0
    assert b_p.shape == (1, Op)

    # Batch tile: full-extent block when B fits in one tile (no padding at
    # all); otherwise the sublane-aligned default with a ragged last block.
    tm_eff = B if B <= tm else tm
    # Column tile: lane-aligned, capped at the padded output width.
    tn_eff = min(_round_up(tn, 128), Op)

    grid_m = pl.cdiv(B, tm_eff)
    grid_n = pl.cdiv(O, tn_eff)

    # VMEM budget: double-buffered x / w / b tiles + output tile.  Capped at
    # 48 MiB so it never reaches v7x's 64 MiB physical VMEM (harmless slack on
    # v5e/v6e's 128 MiB).
    out_bytes = jnp.dtype(out_dtype).itemsize
    per_step = (tm_eff * T * x.dtype.itemsize
                + T * tn_eff * w_p.dtype.itemsize
                + tn_eff * 4
                + tm_eff * tn_eff * out_bytes)
    vmem_limit = int(min(48 << 20, max(16 << 20, 4 * per_step)))

    if grid_n == 1:
        # Common SelfWeight case (O = 3*node*out is small): 1-D batch grid,
        # weight/bias blocks stay resident and are DMA'd exactly once.
        grid = (grid_m,)
        in_specs = [
            pl.BlockSpec((tm_eff, T), lambda i: (i, 0)),     # x batch strip
            pl.BlockSpec((T, tn_eff), lambda i: (0, 0)),     # resident weight
            pl.BlockSpec((1, tn_eff), lambda i: (0, 0)),     # resident bias
        ]
        out_specs = pl.BlockSpec((tm_eff, tn_eff), lambda i: (i, 0))
        dims = ("parallel",)
    else:
        grid = (grid_m, grid_n)
        in_specs = [
            pl.BlockSpec((tm_eff, T), lambda i, j: (i, 0)),
            pl.BlockSpec((T, tn_eff), lambda i, j: (0, j)),
            pl.BlockSpec((1, tn_eff), lambda i, j: (0, j)),
        ]
        out_specs = pl.BlockSpec((tm_eff, tn_eff), lambda i, j: (i, j))
        dims = ("parallel", "parallel")

    y = pl.pallas_call(
        selfweight_kernel,
        out_shape=jax.ShapeDtypeStruct((B, O), out_dtype),
        grid=grid,
        in_specs=in_specs,
        out_specs=out_specs,
        compiler_params=pltpu.CompilerParams(
            dimension_semantics=dims,
            vmem_limit_bytes=vmem_limit,
        ),
    )(x, w_p, b_p)

    if reshape_output:
        # Spec parity with the PyTorch module.  Note this hands downstream ops
        # a lane-sparse trailing dim (node_emb_size); prefer the flat slab
        # (reshape_output=False) for further Pallas consumption.
        return y.reshape(B, 3, out_size, node_emb_size)
    return y


def self_weight_ref(x, w, b, *, node_emb_size, out_size, use_bf16=True):
    """Pure-JAX reference (Linear + tanh + reshape). w: (O, T) as in nn.Linear."""
    dt = jnp.bfloat16 if use_bf16 else jnp.float32
    y = jnp.dot(x.astype(dt), jnp.transpose(w).astype(dt),
                preferred_element_type=jnp.float32) + b.astype(jnp.float32)
    y = jnp.tanh(y)
    return y.reshape(x.shape[0], 3, out_size, node_emb_size)


if __name__ == "__main__":
    key = jax.random.PRNGKey(0)

    def run_case(B, topo_emb_size, node_emb_size, out_size, tm, tn,
                 use_bf16, out_dtype, atol):
        O = 3 * node_emb_size * out_size
        kx, kw, kb = jax.random.split(jax.random.fold_in(key, B * 1000 + O), 3)
        x = jax.random.normal(kx, (B, topo_emb_size), dtype=jnp.float32)
        w = jax.random.normal(kw, (O, topo_emb_size), dtype=jnp.float32) * 0.1
        b = jax.random.normal(kb, (O,), dtype=jnp.float32) * 0.1

        w_p, b_p = prepare_params(w, b, use_bf16=use_bf16)   # one-time prep
        out = self_weight(x, w_p, b_p, node_emb_size=node_emb_size,
                          out_size=out_size, tm=tm, tn=tn, out_dtype=out_dtype)
        out = jax.block_until_ready(out)
        assert out.shape == (B, 3, out_size, node_emb_size)

        ref = self_weight_ref(x, w, b, node_emb_size=node_emb_size,
                              out_size=out_size, use_bf16=use_bf16)
        assert jnp.allclose(out.astype(jnp.float32), ref, atol=atol, rtol=atol)
        # Relaxed check vs the full-f32 torch-equivalent reference.
        ref_f32 = self_weight_ref(x, w, b, node_emb_size=node_emb_size,
                                  out_size=out_size, use_bf16=False)
        assert jnp.allclose(out.astype(jnp.float32), ref_f32, atol=5e-2, rtol=5e-2)

    # Primary small case matching the module (bf16 MXU feed, bf16 output).
    run_case(B=2, topo_emb_size=32, node_emb_size=8, out_size=4,
             tm=512, tn=512, use_bf16=True, out_dtype=jnp.bfloat16, atol=2e-2)
    # f32 parity path (e.g. v5e full-precision runs).
    run_case(B=2, topo_emb_size=32, node_emb_size=8, out_size=4,
             tm=512, tn=512, use_bf16=False, out_dtype=jnp.float32, atol=5e-3)
    # Ragged multi-tile batch + multi-column-tile grid (exercises 2-D path).
    run_case(B=300, topo_emb_size=32, node_emb_size=8, out_size=16,
             tm=128, tn=128, use_bf16=True, out_dtype=jnp.bfloat16, atol=2e-2)

    print("KERNEL_OK")
</pallas_src>

<mosaic_0001>
module attributes {stable_mosaic.version = 11 : i64} {
  func.func @selfweight_kernel(%arg0: i32, %arg1: memref<2x32xf32, #tpu.memory_space<vmem>>, %arg2: memref<32x128xbf16, #tpu.memory_space<vmem>>, %arg3: memref<1x128xf32, #tpu.memory_space<vmem>>, %arg4: memref<2x128xbf16, #tpu.memory_space<vmem>>) attributes {dimension_semantics = [#tpu.dimension_semantics<parallel>], iteration_bounds = array<i64: 1>, scalar_prefetch = 0 : i64, scratch_operands = 0 : i64, tpu.core_type = #tpu.core_type<tc>, window_params = [{transform_indices = @transform_0, window_bounds = array<i64: 2, 32>}, {pipeline_mode = #tpu.pipeline_mode<synchronous>, transform_indices = @transform_1, window_bounds = array<i64: 32, 128>}, {pipeline_mode = #tpu.pipeline_mode<synchronous>, transform_indices = @transform_2, window_bounds = array<i64: 1, 128>}, {transform_indices = @transform_3, window_bounds = array<i64: 2, 128>}]} {
    %c0 = arith.constant 0 : index
    %c0_0 = arith.constant 0 : index
    %0 = vector.load %arg1[%c0, %c0_0] : memref<2x32xf32, #tpu.memory_space<vmem>>, vector<2x32xf32>
    %1 = arith.truncf %0 : vector<2x32xf32> to vector<2x32xbf16>
    %c0_1 = arith.constant 0 : index
    %c0_2 = arith.constant 0 : index
    %2 = vector.load %arg2[%c0_1, %c0_2] : memref<32x128xbf16, #tpu.memory_space<vmem>>, vector<32x128xbf16>
    %cst = arith.constant dense<0.000000e+00> : vector<2x128xf32>
    %3 = tpu.matmul %1, %2, %cst {dimension_numbers = #tpu.dot_dimension_numbers<[1], [0], [0], [1], [0, 0, 1, 1], [], []>} : vector<2x32xbf16>, vector<32x128xbf16>, vector<2x128xf32> -> vector<2x128xf32>
    %c0_3 = arith.constant 0 : index
    %c0_4 = arith.constant 0 : index
    %4 = vector.load %arg3[%c0_3, %c0_4] : memref<1x128xf32, #tpu.memory_space<vmem>>, vector<1x128xf32>
    %5 = vector.broadcast %4 : vector<1x128xf32> to vector<2x128xf32>
    %6 = arith.addf %3, %5 : vector<2x128xf32>
    %7 = math.tanh %6 : vector<2x128xf32>
    %8 = arith.truncf %7 : vector<2x128xf32> to vector<2x128xbf16>
    %c0_5 = arith.constant 0 : index
    %c0_6 = arith.constant 0 : index
    %9 = vector.load %arg4[%c0_5, %c0_6] : memref<2x128xbf16, #tpu.memory_space<vmem>>, vector<2x128xbf16>
    tpu.vector_store %arg4[%c0_5, %c0_6], %8 {strides = array<i32>} : memref<2x128xbf16, #tpu.memory_space<vmem>>, vector<2x128xbf16>,
    return
  }
  func.func @transform_0(%arg0: i32) -> (i32, i32) {
    %c0_i32 = arith.constant 0 : i32
    %c0_i32_0 = arith.constant 0 : i32
    return %arg0, %c0_i32 : i32, i32
  }
  func.func @transform_1(%arg0: i32) -> (i32, i32) {
    %c0_i32 = arith.constant 0 : i32
    %c0_i32_0 = arith.constant 0 : i32
    %c0_i32_1 = arith.constant 0 : i32
    return %c0_i32, %c0_i32_0 : i32, i32
  }
  func.func @transform_2(%arg0: i32) -> (i32, i32) {
    %c0_i32 = arith.constant 0 : i32
    %c0_i32_0 = arith.constant 0 : i32
    %c0_i32_1 = arith.constant 0 : i32
    return %c0_i32, %c0_i32_0 : i32, i32
  }
  func.func @transform_3(%arg0: i32) -> (i32, i32) {
    %c0_i32 = arith.constant 0 : i32
    %c0_i32_0 = arith.constant 0 : i32
    return %arg0, %c0_i32 : i32, i32
  }
}

</mosaic_0001>

<llo_original>
// kernel: tpu_custom_call.1
$region0: #{tpu_custom_call.1}
  #allocation0 [shape = 'u32[]', space=smem, size = 0x4, offset = 0x4, fixed_abs, tag = 'smem constant byte address 0x4 - core index']
  #allocation1 [shape = 'u32[144,128]{1,0:T(1,128)}', space=vmem, size = 0x12000, scoped, tag = 'internal scratch']
  %s0 = inlined_call_operand.hbm [shape: f32[2,32], index: 0, kind: input, shape index: {}]
  %s1 = inlined_call_operand.hbm [shape: bf16[32,128], index: 1, kind: input, shape index: {}]
  %s2 = inlined_call_operand.vmem [shape: f32[1,128], index: 2, kind: input, shape index: {}]
  %s3 = inlined_call_operand.hbm [shape: bf16[2,96], index: 3, kind: output, shape index: {}]
  %s4 = sld [smem:[#allocation0]]
  $region30: #{tpu_custom_call.1} parent=0
    _
  %s6 = ssub.s32 1, %s4
  %s7 = scalar_select 0, %s6, %s4
  $region1: #{tpu_custom_call.1} parent=0
    #allocation2 [shape = 'u8[1024]{0}', space=vmem, size = 0x400, scoped, tag = 'input window, operand 0, single buffered']
    #allocation3 [shape = 's32[1]{0}', space=sflag, size = 0x4, scoped, tag = 'scoped memory for tpu_custom_call.1']
    #allocation4 [shape = 's32[1]{0}', space=sflag, size = 0x4, scoped, tag = 'scoped memory for tpu_custom_call.1']
    #allocation5 [shape = 'u8[8192]{0}', space=vmem, size = 0x2000, scoped, tag = 'input window, operand 1, single buffered']
    #allocation6 [shape = 's32[1]{0}', space=sflag, size = 0x4, scoped, tag = 'scoped memory for tpu_custom_call.1']
    #allocation7 [shape = 'u8[512]{0}', space=vmem, size = 0x400, scoped, tag = 'output window, operand 0, single buffered']
    %8 = vsyncpa [#allocation3], 0
    %9 = vsyncpa [#allocation6], 0
    %10 = vsyncpa [#allocation4], 0
    // Predicated region
    $region2: #{tpu_custom_call.1} parent=1 // pred_check
      _
    $region3: #{tpu_custom_call.1} parent=1 // pred_check_branch
      %12 = sbr.rel (0) target = $region5
    $region4: #{tpu_custom_call.1} parent=1 // pred_region
      %s14 = ssub.s32 32, 32
      %15 = vsyncadd [#allocation3], %s14
      %s17 = sshll.u32 [#allocation2], 4
      %s18 = int_to_ptr.vmem [resolvable:$true] %s17
      %20 = dma.hbm_to_vmem [thread:$0]  %s0, 32, %s18, [#allocation3]
    $region5: #{tpu_custom_call.1} parent=1 // pred_fallthru
      _
    // Predicated region
    $region6: #{tpu_custom_call.1} parent=1 // pred_check
      _
    $region7: #{tpu_custom_call.1} parent=1 // pred_check_branch
      %22 = sbr.rel (0) target = $region9
    $region8: #{tpu_custom_call.1} parent=1 // pred_region
      %s24 = ssub.s32 256, 256
      %25 = vsyncadd [#allocation6], %s24
      %s26 = sshll.u32 [#allocation5], 4
      %s27 = int_to_ptr.vmem [resolvable:$true] %s26
      %32 = dma.hbm_to_vmem [thread:$0]  %s1, 256, %s27, [#allocation6], 64, 64, 4
    $region9: #{tpu_custom_call.1} parent=1 // pred_fallthru
      _
    // Predicated region
    $region10: #{tpu_custom_call.1} parent=1 // pred_check
      _
    $region11: #{tpu_custom_call.1} parent=1 // pred_check_branch
      %34 = sbr.rel (0) target = $region13
    $region12: #{tpu_custom_call.1} parent=1 // pred_region
      _
    $region13: #{tpu_custom_call.1} parent=1 // pred_fallthru
      _
    // Predicated region
    $region14: #{tpu_custom_call.1} parent=1 // pred_check
      _
    $region15: #{tpu_custom_call.1} parent=1 // pred_check_branch
      %36 = sbr.rel (0) target = $region17
    $region16: #{tpu_custom_call.1} parent=1 // pred_region
      %37 = dma.done [#allocation3], 32
    $region17: #{tpu_custom_call.1} parent=1 // pred_fallthru
      _
    // Predicated region
    $region18: #{tpu_custom_call.1} parent=1 // pred_check
      _
    $region19: #{tpu_custom_call.1} parent=1 // pred_check_branch
      %39 = sbr.rel (0) target = $region21
    $region20: #{tpu_custom_call.1} parent=1 // pred_region
      %40 = dma.done [#allocation6], 256
    $region21: #{tpu_custom_call.1} parent=1 // pred_fallthru
      _
    %v42 = vld [vmem:[#allocation2] sm:$0x3]
    %v43 = vpack.c.bf16 %v42, %v42
    %v44 = vld [vmem:[#allocation5] sm:$0xf]
    %v45 = vld [vmem:[#allocation5 + $0x4] sm:$0xf]
    %v46 = vld [vmem:[#allocation5 + $0x8] sm:$0xf]
    %v47 = vld [vmem:[#allocation5 + $0xc] sm:$0xf]
    %v48 = vld [vmem:[%s2] sm:$0x1]
    %v50 = vlaneseq
    %v51 = vshrl.u32 %v50, 7
    %v52 = vsub.s32 0, %v51
    %v53 = vrot.slane %v48, %v52
    %v59 = vunpack.c.l.b16 %v44
    %v60 = vunpack.c.l.b16 %v45
    %v61 = vunpack.c.l.b16 %v46
    %v62 = vunpack.c.l.b16 %v47
    %v63 = vpack.c.b16 %v60, %v59
    %v64 = vpack.c.b16 %v62, %v61
    %vm67 = vcmask 261120
    %v69 = vsel %vm67, %v43, 0
    %71 = vmatprep.subr.bf16.mxu0 0
    %72 = vmatpush1.bf16.msra.mxu0 %v63
    %73 = vmatprep.subr.bf16.mxu0 0
    %74 = vmatpush1.bf16.msra.mxu0 %v64
    %75 = vmatprep.subr.bf16.mxu0 0
    %76 = vmatpush1.bf16.msra.mxu0 0
    %77 = vmatprep.subr.bf16.mxu0 0
    %78 = vmatpush1.bf16.msra.mxu0 0
    %79 = vmatprep.subr.bf16.mxu0 0
    %80 = vmatpush1.bf16.msra.mxu0 0
    %81 = vmatprep.subr.bf16.mxu0 0
    %82 = vmatpush1.bf16.msra.mxu0 0
    %83 = vmatprep.subr.bf16.mxu0 0
    %84 = vmatpush1.bf16.msra.mxu0 0
    %85 = vmatprep.subr.bf16.mxu0 0
    %86 = vmatpush1.bf16.msra.mxu0 0
    %87 = vmatprep.subr.bf16.mxu0 0
    %88 = vmatpush1.bf16.msra.mxu0 0
    %89 = vmatprep.subr.bf16.mxu0 0
    %90 = vmatpush1.bf16.msra.mxu0 0
    %91 = vmatprep.subr.bf16.mxu0 0
    %92 = vmatpush1.bf16.msra.mxu0 0
    %93 = vmatprep.subr.bf16.mxu0 0
    %94 = vmatpush1.bf16.msra.mxu0 0
    %95 = vmatprep.subr.bf16.mxu0 0
    %96 = vmatpush1.bf16.msra.mxu0 0
    %97 = vmatprep.subr.bf16.mxu0 0
    %98 = vmatpush1.bf16.msra.mxu0 0
    %99 = vmatprep.subr.bf16.mxu0 0
    %100 = vmatpush1.bf16.msra.mxu0 0
    %101 = vmatprep.subr.bf16.mxu0 0
    %102 = vmatpush1.bf16.msra.mxu0 0
    %103 = vmatprep.mubr.bf16.mxu0 0
    %104 = vmatmul.mubr.bf16.gmra.mrb[0].mxu0 %v69
    %v105 = vpop.f32.mrb[0].mxu0
    %v106 = vadd.f32 %v53, %v105
    %v107 = vpop.f32.mrb[0].mxu0
    %v108 = vpop.f32.mrb[0].mxu0
    %v109 = vpop.f32.mrb[0].mxu0
    %110 = vdwg.mxu0
    %v111 = vtanh.pop %v106
    %v112 = vpack.c.bf16 %v111, %v111
    %113 = vst [vmem:[#allocation7] sm:$0x1] %v112
    // Predicated region
    $region22: #{tpu_custom_call.1} parent=1 // pred_check
      _
    $region23: #{tpu_custom_call.1} parent=1 // pred_check_branch
      %115 = sbr.rel (0) target = $region25
    $region24: #{tpu_custom_call.1} parent=1 // pred_region
      %s117 = ssub.s32 16, 16
      %118 = vsyncadd [#allocation4], %s117
      %s120 = sshll.u32 [#allocation7], 4
      %s121 = int_to_ptr.vmem [resolvable:$true] %s120
      %123 = dma.vmem_to_hbm [thread:$0]  %s121, 16, %s3, [#allocation4]
    $region25: #{tpu_custom_call.1} parent=1 // pred_fallthru
      _
    // Predicated region
    $region26: #{tpu_custom_call.1} parent=1 // pred_check
      _
    $region27: #{tpu_custom_call.1} parent=1 // pred_check_branch
      %125 = sbr.rel (0) target = $region29
    $region28: #{tpu_custom_call.1} parent=1 // pred_region
      %126 = dma.done [#allocation4], 16
    $region29: #{tpu_custom_call.1} parent=1 // pred_fallthru
      _
    %127 = vsyncpa [#allocation3], 1
    %128 = vsyncpa [#allocation6], 1
    %129 = vsyncpa [#allocation4], 1

</llo_original>
